<compile_context>
chip_gen: v6e
topology: v6e:2x2x1
jax: 0.10.0
libtpu: 0.0.40
codegen_flags: <defaults>
</compile_context>

<pallas_src>
import functools

import jax
import jax.numpy as jnp
from jax import lax
from jax.experimental import pallas as pl
from jax.experimental.pallas import tpu as pltpu


def _round_up(n, m):
    return ((n + m - 1) // m) * m


def _cdiv(a, b):
    return (a + b - 1) // b


# dot_general dimension numbers (2-D operands).
_NN = (((1,), (0,)), ((), ()))   # a @ b
_NT = (((1,), (1,)), ((), ()))   # a @ b.T
_TN = (((0,), (0,)), ((), ()))   # a.T @ b


def _actor_kernel(num_layers, x_ref, *refs):
    """Fused MLP: (Linear -> tanh) x (num_layers-1) -> Linear.

    refs = (w_0, b_0, w_1, b_1, ..., w_{L-1}, b_{L-1}, out_ref)
      x_ref:            (bn, in_dim)   batch-major input block
      hidden  w_l, b_l: (d_out, d_in), (d_out, 1)        (PyTorch layout)
      final   w_t, b:   (d_in, d_out), (1, d_out)        (transposed in the wrapper)
      out_ref:          (bn, out_dim)  batch-major output block
    """
    out_ref = refs[-1]
    params = refs[:-1]

    x = x_ref[...]                                   # (bn, in_dim), f32

    if num_layers == 1:
        w_t = params[0][...]                         # (in, out)
        b = params[1][...]                           # (1, out)
        out = lax.dot_general(x, w_t, _NN, preferred_element_type=jnp.float32) + b
        out_ref[...] = out.astype(out_ref.dtype)
        return

    # Layer 0: relayout batch-major x -> feature-major h on the MXU feed path.
    w0 = params[0][...]                              # (hidden, in)
    b0 = params[1][...]                              # (hidden, 1)
    h = jnp.tanh(
        lax.dot_general(w0, x, _NT, preferred_element_type=jnp.float32) + b0)

    # Middle hidden layers stay feature-major: (hidden, bn), lane-dense.
    for layer in range(1, num_layers - 1):
        w = params[2 * layer][...]                   # (hidden, hidden)
        b = params[2 * layer + 1][...]               # (hidden, 1)
        h = jnp.tanh(
            lax.dot_general(w, h, _NN, preferred_element_type=jnp.float32) + b)

    # Final linear layer: back to batch-major on the MXU output path.
    w_t = params[-2][...]                            # (hidden, out) = W_last.T
    b = params[-1][...]                              # (1, out)
    out = lax.dot_general(h, w_t, _TN, preferred_element_type=jnp.float32) + b
    out_ref[...] = out.astype(out_ref.dtype)


def _choose_bn(batch, block_batch):
    """Batch-tile size: multiple of 128 (lane axis of the feature-major hidden
    activations), bounded pad waste, >=2 tiles once there is enough work to feed
    both v7x TensorCores, never larger than the (8-aligned) batch."""
    padded128 = _round_up(batch, 128)
    tiles = _cdiv(padded128, block_batch)
    if tiles == 1 and padded128 >= 2048:
        tiles = 2
    bn = _round_up(_cdiv(padded128, tiles), 128)
    return min(bn, _round_up(batch, 8))


def actor_forward(x, weights, biases, *, block_batch=4096):
    """Actor forward.

    x:          (batch, input_dim)  float32
    weights[i]: (out_i, in_i)       PyTorch nn.Linear layout
    biases[i]:  (out_i,)
    returns     (batch, output_dim)
    """
    num_layers = len(weights)
    if num_layers < 1:
        raise ValueError("number of layers should be positive!")
    batch, input_dim = x.shape
    out_dim = weights[-1].shape[0]

    bn = _choose_bn(batch, block_batch)
    grid = (_cdiv(batch, bn),)   # ragged tail handled by Pallas boundary masking

    in_specs = [pl.BlockSpec((bn, input_dim), lambda i: (i, 0))]
    params = []
    for layer, (w, b) in enumerate(zip(weights, biases)):
        if layer == num_layers - 1:
            w = w.T                    # (in, out): TN/NN contraction in-kernel
            b = b.reshape(1, -1)       # row bias, broadcasts over batch sublanes
        else:
            b = b.reshape(-1, 1)       # column bias, broadcasts over batch lanes
        # Constant index_map -> weights/biases stay VMEM-resident across the grid.
        in_specs.append(pl.BlockSpec(w.shape, lambda i: (0, 0)))
        in_specs.append(pl.BlockSpec(b.shape, lambda i: (0, 0)))
        params.extend([w, b])

    out_specs = pl.BlockSpec((bn, out_dim), lambda i: (i, 0))

    kernel = functools.partial(_actor_kernel, num_layers)
    return pl.pallas_call(
        kernel,
        out_shape=jax.ShapeDtypeStruct((batch, out_dim), x.dtype),
        grid_spec=pltpu.PrefetchScalarGridSpec(
            num_scalar_prefetch=0,
            grid=grid,
            in_specs=in_specs,
            out_specs=out_specs,
        ),
        compiler_params=pltpu.CompilerParams(
            # Batch tiles are independent -> shard across TensorCores (v7x megacore).
            dimension_semantics=("parallel",),
            # Headroom for large batch tiles on every generation (<= 32 MiB scoped;
            # physical VMEM is 128 MiB on v5e/v6e, 64 MiB on v7x).
            vmem_limit_bytes=32 * 1024 * 1024,
        ),
    )(x, *params)


def init_actor_params(key, num_layers, input_dim, hidden_dim, output_dim):
    """Deterministic parameters matching the nn.Module layer shapes.

    Weights in PyTorch layout (out_dim, in_dim); biases as 1-D (out_dim,).
    """
    if num_layers < 1:
        raise ValueError("number of layers should be positive!")
    if num_layers == 1:
        dims = [(input_dim, output_dim)]
    else:
        dims = [(input_dim, hidden_dim)]
        dims += [(hidden_dim, hidden_dim)] * (num_layers - 2)
        dims += [(hidden_dim, output_dim)]

    weights, biases = [], []
    for (d_in, d_out) in dims:
        key, kw, kb = jax.random.split(key, 3)
        bound = 1.0 / jnp.sqrt(d_in)   # mimic PyTorch default uniform init scale
        weights.append(jax.random.uniform(kw, (d_out, d_in), jnp.float32,
                                          minval=-bound, maxval=bound))
        biases.append(jax.random.uniform(kb, (d_out,), jnp.float32,
                                         minval=-bound, maxval=bound))
    return weights, biases


def actor_reference(x, weights, biases):
    h = x
    for i, (w, b) in enumerate(zip(weights, biases)):
        h = h @ w.T + b
        if i < len(weights) - 1:
            h = jnp.tanh(h)
    return h


if __name__ == "__main__":
    key = jax.random.PRNGKey(0)
    num_layers, input_dim, hidden_dim, output_dim = 3, 16, 32, 8

    # Small batch (typical per-env-step Actor call): one tile, one launch, no padding.
    batch = 8
    key, kx = jax.random.split(key)
    x = jax.random.normal(kx, (batch, input_dim), jnp.float32)
    weights, biases = init_actor_params(key, num_layers, input_dim,
                                        hidden_dim, output_dim)

    out = jax.block_until_ready(actor_forward(x, weights, biases))
    ref = actor_reference(x, weights, biases)
    assert out.shape == (batch, output_dim)
    assert jnp.allclose(out, ref, atol=1e-5, rtol=1e-5)

    # Larger ragged batch: multi-tile grid + masked boundary block, no host padding.
    batch2 = 2500
    key, kx2 = jax.random.split(key)
    x2 = jax.random.normal(kx2, (batch2, input_dim), jnp.float32)
    out2 = jax.block_until_ready(actor_forward(x2, weights, biases, block_batch=1024))
    ref2 = actor_reference(x2, weights, biases)
    assert out2.shape == (batch2, output_dim)
    assert jnp.allclose(out2, ref2, atol=1e-5, rtol=1e-5)

    # num_layers == 1 (pure linear) branch.
    w1, b1 = init_actor_params(jax.random.PRNGKey(1), 1, input_dim,
                               hidden_dim, output_dim)
    out3 = jax.block_until_ready(actor_forward(x, w1, b1))
    assert jnp.allclose(out3, actor_reference(x, w1, b1), atol=1e-5, rtol=1e-5)

    print("KERNEL_OK")
</pallas_src>

<mosaic_0001>
module attributes {stable_mosaic.version = 11 : i64} {
  func.func @_actor_kernel(%arg0: i32, %arg1: memref<8x16xf32, #tpu.memory_space<vmem>>, %arg2: memref<32x16xf32, #tpu.memory_space<vmem>>, %arg3: memref<32x1xf32, #tpu.memory_space<vmem>>, %arg4: memref<32x32xf32, #tpu.memory_space<vmem>>, %arg5: memref<32x1xf32, #tpu.memory_space<vmem>>, %arg6: memref<32x8xf32, #tpu.memory_space<vmem>>, %arg7: memref<1x8xf32, #tpu.memory_space<vmem>>, %arg8: memref<8x8xf32, #tpu.memory_space<vmem>>) attributes {dimension_semantics = [#tpu.dimension_semantics<parallel>], iteration_bounds = array<i64: 1>, scalar_prefetch = 0 : i64, scratch_operands = 0 : i64, tpu.core_type = #tpu.core_type<tc>, window_params = [{transform_indices = @transform_0, window_bounds = array<i64: 8, 16>}, {pipeline_mode = #tpu.pipeline_mode<synchronous>, transform_indices = @transform_1, window_bounds = array<i64: 32, 16>}, {pipeline_mode = #tpu.pipeline_mode<synchronous>, transform_indices = @transform_2, window_bounds = array<i64: 32, 1>}, {pipeline_mode = #tpu.pipeline_mode<synchronous>, transform_indices = @transform_3, window_bounds = array<i64: 32, 32>}, {pipeline_mode = #tpu.pipeline_mode<synchronous>, transform_indices = @transform_4, window_bounds = array<i64: 32, 1>}, {pipeline_mode = #tpu.pipeline_mode<synchronous>, transform_indices = @transform_5, window_bounds = array<i64: 32, 8>}, {pipeline_mode = #tpu.pipeline_mode<synchronous>, transform_indices = @transform_6, window_bounds = array<i64: 1, 8>}, {transform_indices = @transform_7, window_bounds = array<i64: 8, 8>}]} {
    %c0 = arith.constant 0 : index
    %c0_0 = arith.constant 0 : index
    %0 = vector.load %arg1[%c0, %c0_0] : memref<8x16xf32, #tpu.memory_space<vmem>>, vector<8x16xf32>
    %c0_1 = arith.constant 0 : index
    %c0_2 = arith.constant 0 : index
    %1 = vector.load %arg2[%c0_1, %c0_2] : memref<32x16xf32, #tpu.memory_space<vmem>>, vector<32x16xf32>
    %c0_3 = arith.constant 0 : index
    %c0_4 = arith.constant 0 : index
    %2 = vector.load %arg3[%c0_3, %c0_4] : memref<32x1xf32, #tpu.memory_space<vmem>>, vector<32x1xf32>
    %cst = arith.constant dense<0.000000e+00> : vector<32x8xf32>
    %3 = tpu.matmul %1, %0, %cst {dimension_numbers = #tpu.dot_dimension_numbers<[1], [1], [0], [0], [0, 0, 1, 0], [], []>} : vector<32x16xf32>, vector<8x16xf32>, vector<32x8xf32> -> vector<32x8xf32>
    %4 = vector.broadcast %2 : vector<32x1xf32> to vector<32x8xf32>
    %5 = arith.addf %3, %4 : vector<32x8xf32>
    %6 = math.tanh %5 : vector<32x8xf32>
    %c0_5 = arith.constant 0 : index
    %c0_6 = arith.constant 0 : index
    %7 = vector.load %arg4[%c0_5, %c0_6] : memref<32x32xf32, #tpu.memory_space<vmem>>, vector<32x32xf32>
    %c0_7 = arith.constant 0 : index
    %c0_8 = arith.constant 0 : index
    %8 = vector.load %arg5[%c0_7, %c0_8] : memref<32x1xf32, #tpu.memory_space<vmem>>, vector<32x1xf32>
    %cst_9 = arith.constant dense<0.000000e+00> : vector<32x8xf32>
    %9 = tpu.matmul %7, %6, %cst_9 {dimension_numbers = #tpu.dot_dimension_numbers<[1], [0], [0], [1], [0, 0, 1, 1], [], []>} : vector<32x32xf32>, vector<32x8xf32>, vector<32x8xf32> -> vector<32x8xf32>
    %10 = vector.broadcast %8 : vector<32x1xf32> to vector<32x8xf32>
    %11 = arith.addf %9, %10 : vector<32x8xf32>
    %12 = math.tanh %11 : vector<32x8xf32>
    %c0_10 = arith.constant 0 : index
    %c0_11 = arith.constant 0 : index
    %13 = vector.load %arg6[%c0_10, %c0_11] : memref<32x8xf32, #tpu.memory_space<vmem>>, vector<32x8xf32>
    %c0_12 = arith.constant 0 : index
    %c0_13 = arith.constant 0 : index
    %14 = vector.load %arg7[%c0_12, %c0_13] : memref<1x8xf32, #tpu.memory_space<vmem>>, vector<1x8xf32>
    %cst_14 = arith.constant dense<0.000000e+00> : vector<8x8xf32>
    %15 = tpu.matmul %12, %13, %cst_14 {dimension_numbers = #tpu.dot_dimension_numbers<[0], [0], [1], [1], [0, 1, 1, 1], [], []>} : vector<32x8xf32>, vector<32x8xf32>, vector<8x8xf32> -> vector<8x8xf32>
    %16 = vector.broadcast %14 : vector<1x8xf32> to vector<8x8xf32>
    %17 = arith.addf %15, %16 : vector<8x8xf32>
    %c0_15 = arith.constant 0 : index
    %c0_16 = arith.constant 0 : index
    %18 = vector.load %arg8[%c0_15, %c0_16] : memref<8x8xf32, #tpu.memory_space<vmem>>, vector<8x8xf32>
    tpu.vector_store %arg8[%c0_15, %c0_16], %17 {strides = array<i32>} : memref<8x8xf32, #tpu.memory_space<vmem>>, vector<8x8xf32>,
    return
  }
  func.func @transform_0(%arg0: i32) -> (i32, i32) {
    %c0_i32 = arith.constant 0 : i32
    %c0_i32_0 = arith.constant 0 : i32
    return %arg0, %c0_i32 : i32, i32
  }
  func.func @transform_1(%arg0: i32) -> (i32, i32) {
    %c0_i32 = arith.constant 0 : i32
    %c0_i32_0 = arith.constant 0 : i32
    %c0_i32_1 = arith.constant 0 : i32
    return %c0_i32, %c0_i32_0 : i32, i32
  }
  func.func @transform_2(%arg0: i32) -> (i32, i32) {
    %c0_i32 = arith.constant 0 : i32
    %c0_i32_0 = arith.constant 0 : i32
    %c0_i32_1 = arith.constant 0 : i32
    return %c0_i32, %c0_i32_0 : i32, i32
  }
  func.func @transform_3(%arg0: i32) -> (i32, i32) {
    %c0_i32 = arith.constant 0 : i32
    %c0_i32_0 = arith.constant 0 : i32
    %c0_i32_1 = arith.constant 0 : i32
    return %c0_i32, %c0_i32_0 : i32, i32
  }
  func.func @transform_4(%arg0: i32) -> (i32, i32) {
    %c0_i32 = arith.constant 0 : i32
    %c0_i32_0 = arith.constant 0 : i32
    %c0_i32_1 = arith.constant 0 : i32
    return %c0_i32, %c0_i32_0 : i32, i32
  }
  func.func @transform_5(%arg0: i32) -> (i32, i32) {
    %c0_i32 = arith.constant 0 : i32
    %c0_i32_0 = arith.constant 0 : i32
    %c0_i32_1 = arith.constant 0 : i32
    return %c0_i32, %c0_i32_0 : i32, i32
  }
  func.func @transform_6(%arg0: i32) -> (i32, i32) {
    %c0_i32 = arith.constant 0 : i32
    %c0_i32_0 = arith.constant 0 : i32
    %c0_i32_1 = arith.constant 0 : i32
    return %c0_i32, %c0_i32_0 : i32, i32
  }
  func.func @transform_7(%arg0: i32) -> (i32, i32) {
    %c0_i32 = arith.constant 0 : i32
    %c0_i32_0 = arith.constant 0 : i32
    return %arg0, %c0_i32 : i32, i32
  }
}

</mosaic_0001>

<llo_original>
// kernel: tpu_custom_call.1
$region0: #{tpu_custom_call.1}
  #allocation0 [shape = 'u32[]', space=smem, size = 0x4, offset = 0x4, fixed_abs, tag = 'smem constant byte address 0x4 - core index']
  #allocation1 [shape = 'u32[144,128]{1,0:T(1,128)}', space=vmem, size = 0x12000, scoped, tag = 'internal scratch']
  %s0 = inlined_call_operand.vmem [shape: f32[8,16], index: 0, kind: input, shape index: {}]
  %s1 = inlined_call_operand.vmem [shape: f32[32,16], index: 1, kind: input, shape index: {}]
  %s2 = inlined_call_operand.vmem [shape: f32[32,1], index: 2, kind: input, shape index: {}]
  %s3 = inlined_call_operand.vmem [shape: f32[32,32], index: 3, kind: input, shape index: {}]
  %s4 = inlined_call_operand.vmem [shape: f32[32,1], index: 4, kind: input, shape index: {}]
  %s5 = inlined_call_operand.vmem [shape: f32[32,8], index: 5, kind: input, shape index: {}]
  %s6 = inlined_call_operand.vmem [shape: f32[1,8], index: 6, kind: input, shape index: {}]
  %s7 = inlined_call_operand.hbm [shape: f32[8,8], index: 7, kind: output, shape index: {}]
  %s8 = sld [smem:[#allocation0]]
  $region38: #{tpu_custom_call.1} parent=0
    _
  %s10 = ssub.s32 1, %s8
  %s11 = scalar_select 0, %s10, %s8
  $region1: #{tpu_custom_call.1} parent=0
    #allocation2 [shape = 'u8[4096]{0}', space=vmem, size = 0x1000, scoped, tag = 'output window, operand 0, single buffered']
    #allocation3 [shape = 's32[1]{0}', space=sflag, size = 0x4, scoped, tag = 'scoped memory for tpu_custom_call.1']
    %12 = vsyncpa [#allocation3], 0
    // Predicated region
    $region2: #{tpu_custom_call.1} parent=1 // pred_check
      _
    $region3: #{tpu_custom_call.1} parent=1 // pred_check_branch
      %14 = sbr.rel (0) target = $region5
    $region4: #{tpu_custom_call.1} parent=1 // pred_region
      _
    $region5: #{tpu_custom_call.1} parent=1 // pred_fallthru
      _
    // Predicated region
    $region6: #{tpu_custom_call.1} parent=1 // pred_check
      _
    $region7: #{tpu_custom_call.1} parent=1 // pred_check_branch
      %16 = sbr.rel (0) target = $region9
    $region8: #{tpu_custom_call.1} parent=1 // pred_region
      _
    $region9: #{tpu_custom_call.1} parent=1 // pred_fallthru
      _
    // Predicated region
    $region10: #{tpu_custom_call.1} parent=1 // pred_check
      _
    $region11: #{tpu_custom_call.1} parent=1 // pred_check_branch
      %18 = sbr.rel (0) target = $region13
    $region12: #{tpu_custom_call.1} parent=1 // pred_region
      _
    $region13: #{tpu_custom_call.1} parent=1 // pred_fallthru
      _
    // Predicated region
    $region14: #{tpu_custom_call.1} parent=1 // pred_check
      _
    $region15: #{tpu_custom_call.1} parent=1 // pred_check_branch
      %20 = sbr.rel (0) target = $region17
    $region16: #{tpu_custom_call.1} parent=1 // pred_region
      _
    $region17: #{tpu_custom_call.1} parent=1 // pred_fallthru
      _
    // Predicated region
    $region18: #{tpu_custom_call.1} parent=1 // pred_check
      _
    $region19: #{tpu_custom_call.1} parent=1 // pred_check_branch
      %22 = sbr.rel (0) target = $region21
    $region20: #{tpu_custom_call.1} parent=1 // pred_region
      _
    $region21: #{tpu_custom_call.1} parent=1 // pred_fallthru
      _
    // Predicated region
    $region22: #{tpu_custom_call.1} parent=1 // pred_check
      _
    $region23: #{tpu_custom_call.1} parent=1 // pred_check_branch
      %24 = sbr.rel (0) target = $region25
    $region24: #{tpu_custom_call.1} parent=1 // pred_region
      _
    $region25: #{tpu_custom_call.1} parent=1 // pred_fallthru
      _
    // Predicated region
    $region26: #{tpu_custom_call.1} parent=1 // pred_check
      _
    $region27: #{tpu_custom_call.1} parent=1 // pred_check_branch
      %26 = sbr.rel (0) target = $region29
    $region28: #{tpu_custom_call.1} parent=1 // pred_region
      _
    $region29: #{tpu_custom_call.1} parent=1 // pred_fallthru
      _
    %v27 = vld [vmem:[%s0] sm:$0xff]
    %v28 = vld [vmem:[%s1] sm:$0xff]
    %v29 = vld [vmem:[%s1 + $0x8] sm:$0xff]
    %v30 = vld [vmem:[%s1 + $0x10] sm:$0xff]
    %v31 = vld [vmem:[%s1 + $0x18] sm:$0xff]
    %v32 = vld [vmem:[%s2] sm:$0xff]
    %v33 = vld [vmem:[%s2 + $0x8] sm:$0xff]
    %v34 = vld [vmem:[%s2 + $0x10] sm:$0xff]
    %v35 = vld [vmem:[%s2 + $0x18] sm:$0xff]
    %37 = vset.pattern.permute.xlu0 0
    %38 = vperm.xlu0 %37, %v32
    %v39 = vpop.permute.xlu0 %38
    %42 = vset.pattern.permute.xlu0 0
    %43 = vperm.xlu0 %42, %v33
    %v44 = vpop.permute.xlu0 %43
    %47 = vset.pattern.permute.xlu0 0
    %48 = vperm.xlu0 %47, %v34
    %v49 = vpop.permute.xlu0 %48
    %52 = vset.pattern.permute.xlu0 0
    %53 = vperm.xlu0 %52, %v35
    %v54 = vpop.permute.xlu0 %53
    %vm56 = vcmask 130048
    %v58 = vsel %vm56, %v28, 0
    %v61 = vsel %vm56, %v29, 0
    %v64 = vsel %vm56, %v30, 0
    %v67 = vsel %vm56, %v31, 0
    %v70 = vsel %vm56, %v27, 0
    %72 = vmatprep.subr.mxu0 0.0
    %73 = vmatpush1.xpose.msra.mxu0 0.0
    %74 = vmatprep.subr.mxu0 0.0
    %75 = vmatpush1.xpose.msra.mxu0 0.0
    %76 = vmatprep.subr.mxu0 0.0
    %77 = vmatpush1.xpose.msra.mxu0 0.0
    %78 = vmatprep.subr.mxu0 0.0
    %79 = vmatpush1.xpose.msra.mxu0 0.0
    %80 = vmatprep.subr.mxu0 0.0
    %81 = vmatpush1.xpose.msra.mxu0 0.0
    %82 = vmatprep.subr.mxu0 0.0
    %83 = vmatpush1.xpose.msra.mxu0 0.0
    %84 = vmatprep.subr.mxu0 0.0
    %85 = vmatpush1.xpose.msra.mxu0 0.0
    %86 = vmatprep.subr.mxu0 0.0
    %87 = vmatpush1.xpose.msra.mxu0 0.0
    %88 = vmatprep.subr.mxu0 0.0
    %89 = vmatpush1.xpose.msra.mxu0 0.0
    %90 = vmatprep.subr.mxu0 0.0
    %91 = vmatpush1.xpose.msra.mxu0 0.0
    %92 = vmatprep.subr.mxu0 0.0
    %93 = vmatpush1.xpose.msra.mxu0 0.0
    %94 = vmatprep.subr.mxu0 0.0
    %95 = vmatpush1.xpose.msra.mxu0 0.0
    %96 = vmatprep.subr.mxu0 0.0
    %97 = vmatpush1.xpose.msra.mxu0 0.0
    %98 = vmatprep.subr.mxu0 0.0
    %99 = vmatpush1.xpose.msra.mxu0 0.0
    %100 = vmatprep.subr.mxu0 0.0
    %101 = vmatpush1.xpose.msra.mxu0 0.0
    %102 = vmatprep.subr.mxu0 0.0
    %103 = vmatpush1.xpose.msra.mxu0 %v70
    %104 = vmatprep.subr.mxu0 0.0
    %105 = vmatpush2.xpose.msra.mxu0 0.0
    %106 = vmatprep.subr.mxu0 0.0
    %107 = vmatpush2.xpose.msra.mxu0 0.0
    %108 = vmatprep.subr.mxu0 0.0
    %109 = vmatpush2.xpose.msra.mxu0 0.0
    %110 = vmatprep.subr.mxu0 0.0
    %111 = vmatpush2.xpose.msra.mxu0 0.0
    %112 = vmatprep.subr.mxu0 0.0
    %113 = vmatpush2.xpose.msra.mxu0 0.0
    %114 = vmatprep.subr.mxu0 0.0
    %115 = vmatpush2.xpose.msra.mxu0 0.0
    %116 = vmatprep.subr.mxu0 0.0
    %117 = vmatpush2.xpose.msra.mxu0 0.0
    %118 = vmatprep.subr.mxu0 0.0
    %119 = vmatpush2.xpose.msra.mxu0 0.0
    %120 = vmatprep.subr.mxu0 0.0
    %121 = vmatpush2.xpose.msra.mxu0 0.0
    %122 = vmatprep.subr.mxu0 0.0
    %123 = vmatpush2.xpose.msra.mxu0 0.0
    %124 = vmatprep.subr.mxu0 0.0
    %125 = vmatpush2.xpose.msra.mxu0 0.0
    %126 = vmatprep.subr.mxu0 0.0
    %127 = vmatpush2.xpose.msra.mxu0 0.0
    %128 = vmatprep.subr.mxu0 0.0
    %129 = vmatpush2.xpose.msra.mxu0 0.0
    %130 = vmatprep.subr.mxu0 0.0
    %131 = vmatpush2.xpose.msra.mxu0 0.0
    %132 = vmatprep.subr.mxu0 0.0
    %133 = vmatpush2.xpose.msra.mxu0 0.0
    %134 = vmatprep.subr.mxu0 0.0
    %135 = vmatpush2.xpose.msra.mxu0 0.0
    %136 = vmatprep.mubr.f32.mxu0 0.0
    %137 = vmatmul.mubr.f32.gmra.mxu0 %v58
    %v138 = vpop.f32.mrf.mxu0
    %v139 = vadd.f32 %v39, %v138
    %v140 = vpop.f32.mrf.mxu0
    %141 = vmatprep.mubr.f32.mxu0 0.0
    %142 = vmatmul.mubr.f32.gmra.mxu0 %v61
    %v143 = vpop.f32.mrf.mxu0
    %v144 = vadd.f32 %v44, %v143
    %v145 = vpop.f32.mrf.mxu0
    %146 = vmatprep.mubr.f32.mxu0 0.0
    %147 = vmatmul.mubr.f32.gmra.mxu0 %v64
    %v148 = vpop.f32.mrf.mxu0
    %v149 = vadd.f32 %v49, %v148
    %v150 = vpop.f32.mrf.mxu0
    %151 = vmatprep.mubr.f32.mxu0 0.0
    %152 = vmatmul.mubr.f32.gmra.mxu0 %v67
    %v153 = vpop.f32.mrf.mxu0
    %v154 = vadd.f32 %v54, %v153
    %v155 = vpop.f32.mrf.mxu0
    %156 = vdwg.mxu0
    %v157 = vtanh.pop %v139
    %v158 = vtanh.pop %v144
    %v159 = vtanh.pop %v149
    %v160 = vtanh.pop %v154
    %v161 = vld [vmem:[%s3] sm:$0xff]
    %v162 = vld [vmem:[%s3 + $0x8] sm:$0xff]
    %v163 = vld [vmem:[%s3 + $0x10] sm:$0xff]
    %v164 = vld [vmem:[%s3 + $0x18] sm:$0xff]
    %v165 = vld [vmem:[%s4] sm:$0xff]
    %v166 = vld [vmem:[%s4 + $0x8] sm:$0xff]
    %v167 = vld [vmem:[%s4 + $0x10] sm:$0xff]
    %v168 = vld [vmem:[%s4 + $0x18] sm:$0xff]
    %170 = vset.pattern.permute.xlu0 0
    %171 = vperm.xlu0 %170, %v165
    %v172 = vpop.permute.xlu0 %171
    %175 = vset.pattern.permute.xlu0 0
    %176 = vperm.xlu0 %175, %v166
    %v177 = vpop.permute.xlu0 %176
    %180 = vset.pattern.permute.xlu0 0
    %181 = vperm.xlu0 %180, %v167
    %v182 = vpop.permute.xlu0 %181
    %185 = vset.pattern.permute.xlu0 0
    %186 = vperm.xlu0 %185, %v168
    %v187 = vpop.permute.xlu0 %186
    %vm189 = vcmask 261120
    %v191 = vsel %vm189, %v161, 0
    %v194 = vsel %vm189, %v162, 0
    %v197 = vsel %vm189, %v163, 0
    %v200 = vsel %vm189, %v164, 0
    %202 = vmatprep.subr.mxu0 0.0
    %203 = vmatpush1.msra.mxu0 0.0
    %204 = vmatprep.subr.mxu0 0.0
    %205 = vmatpush1.msra.mxu0 0.0
    %206 = vmatprep.subr.mxu0 0.0
    %207 = vmatpush1.msra.mxu0 0.0
    %208 = vmatprep.subr.mxu0 0.0
    %209 = vmatpush1.msra.mxu0 0.0
    %210 = vmatprep.subr.mxu0 0.0
    %211 = vmatpush1.msra.mxu0 0.0
    %212 = vmatprep.subr.mxu0 0.0
    %213 = vmatpush1.msra.mxu0 0.0
    %214 = vmatprep.subr.mxu0 0.0
    %215 = vmatpush1.msra.mxu0 0.0
    %216 = vmatprep.subr.mxu0 0.0
    %217 = vmatpush1.msra.mxu0 0.0
    %218 = vmatprep.subr.mxu0 0.0
    %219 = vmatpush1.msra.mxu0 0.0
    %220 = vmatprep.subr.mxu0 0.0
    %221 = vmatpush1.msra.mxu0 0.0
    %222 = vmatprep.subr.mxu0 0.0
    %223 = vmatpush1.msra.mxu0 0.0
    %224 = vmatprep.subr.mxu0 0.0
    %225 = vmatpush1.msra.mxu0 0.0
    %226 = vmatprep.subr.mxu0 0.0
    %227 = vmatpush1.msra.mxu0 %v160
    %228 = vmatprep.subr.mxu0 0.0
    %229 = vmatpush1.msra.mxu0 %v159
    %230 = vmatprep.subr.mxu0 0.0
    %231 = vmatpush1.msra.mxu0 %v158
    %232 = vmatprep.subr.mxu0 0.0
    %233 = vmatpush1.msra.mxu0 %v157
    %234 = vmatprep.subr.mxu0 0.0
    %235 = vmatpush2.msra.mxu0 0.0
    %236 = vmatprep.subr.mxu0 0.0
    %237 = vmatpush2.msra.mxu0 0.0
    %238 = vmatprep.subr.mxu0 0.0
    %239 = vmatpush2.msra.mxu0 0.0
    %240 = vmatprep.subr.mxu0 0.0
    %241 = vmatpush2.msra.mxu0 0.0
    %242 = vmatprep.subr.mxu0 0.0
    %243 = vmatpush2.msra.mxu0 0.0
    %244 = vmatprep.subr.mxu0 0.0
    %245 = vmatpush2.msra.mxu0 0.0
    %246 = vmatprep.subr.mxu0 0.0
    %247 = vmatpush2.msra.mxu0 0.0
    %248 = vmatprep.subr.mxu0 0.0
    %249 = vmatpush2.msra.mxu0 0.0
    %250 = vmatprep.subr.mxu0 0.0
    %251 = vmatpush2.msra.mxu0 0.0
    %252 = vmatprep.subr.mxu0 0.0
    %253 = vmatpush2.msra.mxu0 0.0
    %254 = vmatprep.subr.mxu0 0.0
    %255 = vmatpush2.msra.mxu0 0.0
    %256 = vmatprep.subr.mxu0 0.0
    %257 = vmatpush2.msra.mxu0 0.0
    %258 = vmatprep.subr.mxu0 0.0
    %259 = vmatpush2.msra.mxu0 0.0
    %260 = vmatprep.subr.mxu0 0.0
    %261 = vmatpush2.msra.mxu0 0.0
    %262 = vmatprep.subr.mxu0 0.0
    %263 = vmatpush2.msra.mxu0 0.0
    %264 = vmatprep.subr.mxu0 0.0
    %265 = vmatpush2.msra.mxu0 0.0
    %266 = vmatprep.mubr.f32.mxu0 0.0
    %267 = vmatmul.mubr.f32.gmra.mxu0 %v191
    %v268 = vpop.f32.mrf.mxu0
    %v269 = vadd.f32 %v172, %v268
    %v270 = vpop.f32.mrf.mxu0
    %271 = vmatprep.mubr.f32.mxu0 0.0
    %272 = vmatmul.mubr.f32.gmra.mxu0 %v194
    %v273 = vpop.f32.mrf.mxu0
    %v274 = vadd.f32 %v177, %v273
    %v275 = vpop.f32.mrf.mxu0
    %276 = vmatprep.mubr.f32.mxu0 0.0
    %277 = vmatmul.mubr.f32.gmra.mxu0 %v197
    %v278 = vpop.f32.mrf.mxu0
    %v279 = vadd.f32 %v182, %v278
    %v280 = vpop.f32.mrf.mxu0
    %281 = vmatprep.mubr.f32.mxu0 0.0
    %282 = vmatmul.mubr.f32.gmra.mxu0 %v200
    %v283 = vpop.f32.mrf.mxu0
    %v284 = vadd.f32 %v187, %v283
    %v285 = vpop.f32.mrf.mxu0
    %286 = vdwg.mxu0
    %v287 = vtanh.pop %v269
    %v288 = vtanh.pop %v274
    %v289 = vtanh.pop %v279
    %v290 = vtanh.pop %v284
    %v291 = vld [vmem:[%s5] sm:$0xff]
    %v292 = vld [vmem:[%s5 + $0x8] sm:$0xff]
    %v293 = vld [vmem:[%s5 + $0x10] sm:$0xff]
    %v294 = vld [vmem:[%s5 + $0x18] sm:$0xff]
    %v295 = vld [vmem:[%s6] sm:$0x1]
    %v297 = vlaneseq
    %v298 = vshrl.u32 %v297, 7
    %v299 = vsub.s32 0, %v298
    %v300 = vrot.slane %v295, %v299
    %302 = vxpose.xlu0.b32.start [1/16] %v287, 128
    %303 = vxpose.xlu0.b32.cont [2/16] %v288, 128
    %304 = vxpose.xlu0.b32.cont [3/16] %v289, 128
    %305 = vxpose.xlu0.b32.cont [4/16] %v290, 128
    %306 = vxpose.xlu0.b32.cont [5/16] 0.0, 128
    %307 = vxpose.xlu0.b32.cont [6/16] 0.0, 128
    %308 = vxpose.xlu0.b32.cont [7/16] 0.0, 128
    %309 = vxpose.xlu0.b32.cont [8/16] 0.0, 128
    %310 = vxpose.xlu0.b32.cont [9/16] 0.0, 128
    %311 = vxpose.xlu0.b32.cont [10/16] 0.0, 128
    %312 = vxpose.xlu0.b32.cont [11/16] 0.0, 128
    %313 = vxpose.xlu0.b32.cont [12/16] 0.0, 128
    %314 = vxpose.xlu0.b32.cont [13/16] 0.0, 128
    %315 = vxpose.xlu0.b32.cont [14/16] 0.0, 128
    %316 = vxpose.xlu0.b32.cont [15/16] 0.0, 128
    %317 = vxpose.xlu0.b32.end [16/16] 0.0, 128
    %v318 = vpop.trf.xlu0
    %v319 = vpop.trf.xlu0
    %v320 = vpop.trf.xlu0
    %v321 = vpop.trf.xlu0
    %v322 = vpop.trf.xlu0
    %v323 = vpop.trf.xlu0
    %v324 = vpop.trf.xlu0
    %v325 = vpop.trf.xlu0
    %v326 = vpop.trf.xlu0
    %v327 = vpop.trf.xlu0
    %v328 = vpop.trf.xlu0
    %v329 = vpop.trf.xlu0
    %v330 = vpop.trf.xlu0
    %v331 = vpop.trf.xlu0
    %v332 = vpop.trf.xlu0
    %v333 = vpop.trf.xlu0
    %v335 = vsel %vm189, %v318, 0
    %337 = vmatprep.subr.mxu0 0.0
    %338 = vmatpush1.msra.mxu0 0.0
    %339 = vmatprep.subr.mxu0 0.0
    %340 = vmatpush1.msra.mxu0 0.0
    %341 = vmatprep.subr.mxu0 0.0
    %342 = vmatpush1.msra.mxu0 0.0
    %343 = vmatprep.subr.mxu0 0.0
    %344 = vmatpush1.msra.mxu0 0.0
    %345 = vmatprep.subr.mxu0 0.0
    %346 = vmatpush1.msra.mxu0 0.0
    %347 = vmatprep.subr.mxu0 0.0
    %348 = vmatpush1.msra.mxu0 0.0
    %349 = vmatprep.subr.mxu0 0.0
    %350 = vmatpush1.msra.mxu0 0.0
    %351 = vmatprep.subr.mxu0 0.0
    %352 = vmatpush1.msra.mxu0 0.0
    %353 = vmatprep.subr.mxu0 0.0
    %354 = vmatpush1.msra.mxu0 0.0
    %355 = vmatprep.subr.mxu0 0.0
    %356 = vmatpush1.msra.mxu0 0.0
    %357 = vmatprep.subr.mxu0 0.0
    %358 = vmatpush1.msra.mxu0 0.0
    %359 = vmatprep.subr.mxu0 0.0
    %360 = vmatpush1.msra.mxu0 0.0
    %361 = vmatprep.subr.mxu0 0.0
    %362 = vmatpush1.msra.mxu0 %v294
    %363 = vmatprep.subr.mxu0 0.0
    %364 = vmatpush1.msra.mxu0 %v293
    %365 = vmatprep.subr.mxu0 0.0
    %366 = vmatpush1.msra.mxu0 %v292
    %367 = vmatprep.subr.mxu0 0.0
    %368 = vmatpush1.msra.mxu0 %v291
    %369 = vmatprep.subr.mxu0 0.0
    %370 = vmatpush2.msra.mxu0 0.0
    %371 = vmatprep.subr.mxu0 0.0
    %372 = vmatpush2.msra.mxu0 0.0
    %373 = vmatprep.subr.mxu0 0.0
    %374 = vmatpush2.msra.mxu0 0.0
    %375 = vmatprep.subr.mxu0 0.0
    %376 = vmatpush2.msra.mxu0 0.0
    %377 = vmatprep.subr.mxu0 0.0
    %378 = vmatpush2.msra.mxu0 0.0
    %379 = vmatprep.subr.mxu0 0.0
    %380 = vmatpush2.msra.mxu0 0.0
    %381 = vmatprep.subr.mxu0 0.0
    %382 = vmatpush2.msra.mxu0 0.0
    %383 = vmatprep.subr.mxu0 0.0
    %384 = vmatpush2.msra.mxu0 0.0
    %385 = vmatprep.subr.mxu0 0.0
    %386 = vmatpush2.msra.mxu0 0.0
    %387 = vmatprep.subr.mxu0 0.0
    %388 = vmatpush2.msra.mxu0 0.0
    %389 = vmatprep.subr.mxu0 0.0
    %390 = vmatpush2.msra.mxu0 0.0
    %391 = vmatprep.subr.mxu0 0.0
    %392 = vmatpush2.msra.mxu0 0.0
    %393 = vmatprep.subr.mxu0 0.0
    %394 = vmatpush2.msra.mxu0 0.0
    %395 = vmatprep.subr.mxu0 0.0
    %396 = vmatpush2.msra.mxu0 0.0
    %397 = vmatprep.subr.mxu0 0.0
    %398 = vmatpush2.msra.mxu0 0.0
    %399 = vmatprep.subr.mxu0 0.0
    %400 = vmatpush2.msra.mxu0 0.0
    %401 = vmatprep.mubr.f32.mxu0 0.0
    %402 = vmatmul.mubr.f32.gmra.mxu0 %v335
    %v403 = vpop.f32.mrf.mxu0
    %v404 = vadd.f32 %v300, %v403
    %v405 = vpop.f32.mrf.mxu0
    %406 = vdwg.mxu0
    %vm407 = vcmask 64512
    %408 = vst.msk [vmem:[#allocation2] sm:$0xff] %vm407, %v404
    // Predicated region
    $region30: #{tpu_custom_call.1} parent=1 // pred_check
      _
    $region31: #{tpu_custom_call.1} parent=1 // pred_check_branch
      %410 = sbr.rel (0) target = $region33
    $region32: #{tpu_custom_call.1} parent=1 // pred_region
      %s412 = ssub.s32 128, 128
      %413 = vsyncadd [#allocation3], %s412
      %s415 = sshll.u32 [#allocation2], 4
      %s416 = int_to_ptr.vmem [resolvable:$true] %s415
      %418 = dma.vmem_to_hbm [thread:$0]  %s416, 128, %s7, [#allocation3]
    $region33: #{tpu_custom_call.1} parent=1 // pred_fallthru
      _
    // Predicated region
    $region34: #{tpu_custom_call.1} parent=1 // pred_check
      _
    $region35: #{tpu_custom_call.1} parent=1 // pred_check_branch
      %420 = sbr.rel (0) target = $region37
    $region36: #{tpu_custom_call.1} parent=1 // pred_region
      %421 = dma.done [#allocation3], 128
    $region37: #{tpu_custom_call.1} parent=1 // pred_fallthru
      _
    %422 = vsyncpa [#allocation3], 1

</llo_original>
